<compile_context>
chip_gen: v7x
topology: tpu7x:2x2x1
jax: 0.10.0
libtpu: 0.0.40
codegen_flags: <defaults>
</compile_context>

<pallas_src>
import jax
import jax.numpy as jnp
from jax import lax
from jax.experimental import pallas as pl
from jax.experimental.pallas import tpu as pltpu


# ---------------------------------------------------------------------------
# helpers
# ---------------------------------------------------------------------------

def _pick_tile(dim, preferred, align):
    """Largest multiple of `align` that divides `dim` and is <= `preferred`.
    Falls back to the full dim (always legal: block extent == array extent)."""
    if dim % align != 0:
        return dim
    best = None
    t = align
    while t <= min(dim, preferred):
        if dim % t == 0:
            best = t
        t += align
    return best if best is not None else dim


def _gelu(x):
    # TODO(synk): PyTorch nn.GELU defaults to exact erf; tanh-approx GELU is used
    # here (EUP-friendly lowering).  The in-script reference uses the same formula.
    return jax.nn.gelu(x, approximate=True)


# ---------------------------------------------------------------------------
# Kernel 1: fused dual-modality LayerNorm + linear  (norm1_{v,i} + qkv proj)
# ---------------------------------------------------------------------------

def ln_linear_pallas(x, gamma, beta, w, b, *, eps=1e-5, tm_pref=256):
    """y[m] = LN(x[m]; gamma[m], beta[m]) @ w + b   for m in {0, 1}.

    x: [2, R, Cin], gamma/beta: [2, Cin], w: [Cin, Nout], b: [Nout]
    returns [2, R, Nout].
    """
    two, R, Cin = x.shape
    assert two == 2
    Kw, Nout = w.shape
    assert Kw == Cin
    tm = _pick_tile(R, tm_pref, 8)
    grid = (2, R // tm)

    def kernel(x_ref, g_ref, bt_ref, w_ref, bias_ref, o_ref):
        xv = x_ref[0].astype(jnp.float32)                      # [tm, Cin]
        mu = jnp.mean(xv, axis=-1, keepdims=True)
        xc = xv - mu
        var = jnp.mean(xc * xc, axis=-1, keepdims=True)
        inv = lax.rsqrt(var + eps)
        y = xc * inv * g_ref[0].astype(jnp.float32) + bt_ref[0].astype(jnp.float32)
        acc = jnp.dot(y, w_ref[...].astype(jnp.float32),
                      preferred_element_type=jnp.float32)      # [tm, Nout]
        acc = acc + bias_ref[...].astype(jnp.float32)
        o_ref[0] = acc.astype(o_ref.dtype)

    return pl.pallas_call(
        kernel,
        out_shape=jax.ShapeDtypeStruct((2, R, Nout), x.dtype),
        grid=grid,
        in_specs=[
            pl.BlockSpec((1, tm, Cin), lambda m, i: (m, i, 0)),
            pl.BlockSpec((1, 1, Cin), lambda m, i: (m, 0, 0)),
            pl.BlockSpec((1, 1, Cin), lambda m, i: (m, 0, 0)),
            pl.BlockSpec((Cin, Nout), lambda m, i: (0, 0)),
            pl.BlockSpec((1, Nout), lambda m, i: (0, 0)),
        ],
        out_specs=pl.BlockSpec((1, tm, Nout), lambda m, i: (m, i, 0)),
        compiler_params=pltpu.CompilerParams(
            dimension_semantics=("parallel", "parallel")),
    )(x, gamma.reshape(2, 1, Cin), beta.reshape(2, 1, Cin), w, b.reshape(1, Nout))


# ---------------------------------------------------------------------------
# Kernel 2: fused asymmetric shared attention + output projection + residual
# ---------------------------------------------------------------------------

def attn_proj_res_pallas(qkv, resid, w_proj, b_proj, *, B, num_heads, Lt, scale):
    """Asymmetric shared attention, fused with proj and residual add.

    qkv:   [2B, N, 3C] raw qkv rows (batches 0..B-1 = modality V, B..2B-1 = I)
    resid: [2B, N, C]  residual stream (pre-norm1 x)
    returns resid + proj(attention(qkv))                         [2B, N, C]

    Per grid step (one (modality, batch) slice, all heads):
      rows [:Lt]  = own-modality template self-attention,
      rows [Lt:]  = search attention over (own templates + other-modality
                    templates + own search).  Key order for modality I is a
                    permutation of the reference's (softmax is key-permutation
                    invariant), so results are identical.
    """
    twoB, N, C3 = qkv.shape
    C = C3 // 3
    hd = C // num_heads
    # Other-modality block: only the template rows are needed (smaller DMA) when
    # Lt is sublane-aligned, otherwise fall back to the full token extent.
    oth_rows = Lt if Lt % 8 == 0 else N

    def kernel(own_ref, oth_ref, wp_ref, bp_ref, r_ref, o_ref):
        own = own_ref[0].astype(jnp.float32)                   # [N,   3C]
        oth = oth_ref[0].astype(jnp.float32)                   # [>=Lt, 3C]

        q_all = own[:, :C] * scale                             # scale q, not scores
        k_all = own[:, C:2 * C]
        v_all = own[:, 2 * C:]

        def mha(q2, k2, v2):
            # q2: [Lq, C], k2/v2: [Lk, C]; heads are contiguous hd-wide column slices.
            outs = []
            for h in range(num_heads):
                sl = slice(h * hd, (h + 1) * hd)
                s = lax.dot_general(q2[:, sl], k2[:, sl],
                                    (((1,), (1,)), ((), ())),
                                    preferred_element_type=jnp.float32)  # [Lq, Lk]
                s = s - jnp.max(s, axis=-1, keepdims=True)
                p = jnp.exp(s)
                p = p * pl.reciprocal(jnp.sum(p, axis=-1, keepdims=True), approx=True)
                outs.append(jnp.dot(p, v2[:, sl],
                                    preferred_element_type=jnp.float32))  # [Lq, hd]
            return jnp.concatenate(outs, axis=-1)              # [Lq, C] lane-dense

        # Template self-attention (own modality templates only).
        o_t = mha(q_all[:Lt], k_all[:Lt], v_all[:Lt])

        # Search cross-modal attention: KV = own templates + other-modality
        # templates + own search rows.
        k_s = jnp.concatenate([k_all[:Lt], oth[:Lt, C:2 * C], k_all[Lt:]], axis=0)
        v_s = jnp.concatenate([v_all[:Lt], oth[:Lt, 2 * C:], v_all[Lt:]], axis=0)
        o_s = mha(q_all[Lt:], k_s, v_s)

        attn = jnp.concatenate([o_t, o_s], axis=0)             # [N, C]
        out = jnp.dot(attn, wp_ref[...].astype(jnp.float32),
                      preferred_element_type=jnp.float32)
        out = out + bp_ref[...].astype(jnp.float32) + r_ref[0].astype(jnp.float32)
        o_ref[0] = out.astype(o_ref.dtype)

    return pl.pallas_call(
        kernel,
        out_shape=jax.ShapeDtypeStruct((twoB, N, C), resid.dtype),
        grid=(twoB,),
        in_specs=[
            pl.BlockSpec((1, N, C3), lambda b: (b, 0, 0)),
            pl.BlockSpec((1, oth_rows, C3), lambda b: ((b + B) % (2 * B), 0, 0)),
            pl.BlockSpec((C, C), lambda b: (0, 0)),
            pl.BlockSpec((1, C), lambda b: (0, 0)),
            pl.BlockSpec((1, N, C), lambda b: (b, 0, 0)),
        ],
        out_specs=pl.BlockSpec((1, N, C), lambda b: (b, 0, 0)),
        compiler_params=pltpu.CompilerParams(dimension_semantics=("parallel",)),
    )(qkv, qkv, w_proj, b_proj.reshape(1, C), resid)


# ---------------------------------------------------------------------------
# Kernel 3: fused dual-modality LayerNorm + MLP (fc1+GELU+fc2) + residual
# ---------------------------------------------------------------------------

def ln_mlp_res_pallas(x, gamma, beta, w1, b1, w2, b2, *, eps=1e-5, tm_pref=256):
    """y[m] = x[m] + fc2(gelu(fc1(LN(x[m]; gamma[m], beta[m]))))   for m in {0,1}.

    x: [2, R, C], gamma/beta: [2, C], w1: [C, Ch], b1: [Ch], w2: [Ch, C], b2: [C]
    """
    two, R, C = x.shape
    assert two == 2
    Cw, Ch = w1.shape
    assert Cw == C and w2.shape == (Ch, C)
    tm = _pick_tile(R, tm_pref, 8)
    grid = (2, R // tm)

    def kernel(x_ref, g_ref, bt_ref, w1_ref, b1_ref, w2_ref, b2_ref, o_ref):
        xv = x_ref[0].astype(jnp.float32)                      # [tm, C]
        mu = jnp.mean(xv, axis=-1, keepdims=True)
        xc = xv - mu
        var = jnp.mean(xc * xc, axis=-1, keepdims=True)
        inv = lax.rsqrt(var + eps)
        y = xc * inv * g_ref[0].astype(jnp.float32) + bt_ref[0].astype(jnp.float32)
        h = jnp.dot(y, w1_ref[...].astype(jnp.float32),
                    preferred_element_type=jnp.float32)
        h = _gelu(h + b1_ref[...].astype(jnp.float32))         # [tm, Ch], VMEM-only
        out = jnp.dot(h, w2_ref[...].astype(jnp.float32),
                      preferred_element_type=jnp.float32)
        out = out + b2_ref[...].astype(jnp.float32) + xv       # residual
        o_ref[0] = out.astype(o_ref.dtype)

    return pl.pallas_call(
        kernel,
        out_shape=jax.ShapeDtypeStruct((2, R, C), x.dtype),
        grid=grid,
        in_specs=[
            pl.BlockSpec((1, tm, C), lambda m, i: (m, i, 0)),
            pl.BlockSpec((1, 1, C), lambda m, i: (m, 0, 0)),
            pl.BlockSpec((1, 1, C), lambda m, i: (m, 0, 0)),
            pl.BlockSpec((C, Ch), lambda m, i: (0, 0)),
            pl.BlockSpec((1, Ch), lambda m, i: (0, 0)),
            pl.BlockSpec((Ch, C), lambda m, i: (0, 0)),
            pl.BlockSpec((1, C), lambda m, i: (0, 0)),
        ],
        out_specs=pl.BlockSpec((1, tm, C), lambda m, i: (m, i, 0)),
        compiler_params=pltpu.CompilerParams(
            dimension_semantics=("parallel", "parallel")),
    )(x, gamma.reshape(2, 1, C), beta.reshape(2, 1, C),
      w1, b1.reshape(1, Ch), w2, b2.reshape(1, C))


# ---------------------------------------------------------------------------
# Block_Shared forward (glue reshapes in JAX, all heavy work in 3 Pallas calls)
# ---------------------------------------------------------------------------

def block_shared_forward(x_v, x_i, p, num_heads, t_h, t_w, s_h, s_w):
    B, N, C = x_v.shape
    assert C % num_heads == 0
    hd = C // num_heads
    scale = float(hd) ** -0.5
    Lt = t_h * t_w * 2
    Ls = s_h * s_w
    assert N == Lt + Ls
    R = B * N

    x_vi = jnp.concatenate([x_v, x_i], axis=0)                 # [2B, N, C]

    # norm1_v / norm1_i fused with the shared qkv projection
    qkv = ln_linear_pallas(
        x_vi.reshape(2, R, C),
        jnp.stack([p['ln1_v_g'], p['ln1_i_g']]),
        jnp.stack([p['ln1_v_b'], p['ln1_i_b']]),
        p['w_qkv'], p['b_qkv'])                                # [2, R, 3C]
    qkv = qkv.reshape(2 * B, N, 3 * C)                         # free reshape

    # asymmetric shared attention + proj + residual 1, all fused
    x_vi = attn_proj_res_pallas(qkv, x_vi, p['w_proj'], p['b_proj'],
                                B=B, num_heads=num_heads, Lt=Lt, scale=scale)

    # norm2_v / norm2_i fused with the MLP and residual 2
    x_vi = ln_mlp_res_pallas(
        x_vi.reshape(2, R, C),
        jnp.stack([p['ln2_v_g'], p['ln2_i_g']]),
        jnp.stack([p['ln2_v_b'], p['ln2_i_b']]),
        p['w_fc1'], p['b_fc1'], p['w_fc2'], p['b_fc2']).reshape(2 * B, N, C)

    return x_vi[:B], x_vi[B:]


# ---------------------------------------------------------------------------
# Pure-JAX reference (mirrors the PyTorch module; tanh-approx GELU as noted)
# ---------------------------------------------------------------------------

def block_shared_reference(x_v, x_i, p, num_heads, t_h, t_w, s_h, s_w):
    B, N, C = x_v.shape
    hd = C // num_heads
    scale = float(hd) ** -0.5
    Lt = t_h * t_w * 2

    def ln(x, g, b, eps=1e-5):
        mu = jnp.mean(x, axis=-1, keepdims=True)
        var = jnp.mean((x - mu) ** 2, axis=-1, keepdims=True)
        return (x - mu) / jnp.sqrt(var + eps) * g + b

    x_vi = jnp.concatenate([x_v, x_i], axis=0)
    x = jnp.concatenate([ln(x_v, p['ln1_v_g'], p['ln1_v_b']),
                         ln(x_i, p['ln1_i_g'], p['ln1_i_b'])], axis=0)

    qkv = (x @ p['w_qkv'] + p['b_qkv']).reshape(2 * B, N, 3, num_heads, hd)
    qkv = jnp.transpose(qkv, (2, 0, 3, 1, 4))
    q, k, v = qkv[0], qkv[1], qkv[2]
    qV, qI = q[:B], q[B:]
    kV, kI = k[:B], k[B:]
    vV, vI = v[:B], v[B:]

    def sdpa(qh, kh, vh):
        s = jnp.einsum('bhqd,bhkd->bhqk', qh, kh) * scale
        pr = jax.nn.softmax(s, axis=-1)
        o = jnp.einsum('bhqk,bhkd->bhqd', pr, vh)
        return o.transpose(0, 2, 1, 3).reshape(qh.shape[0], qh.shape[2], C)

    k_mt = jnp.concatenate([kV[:, :, :Lt], kI[:, :, :Lt]], axis=2)
    v_mt = jnp.concatenate([vV[:, :, :Lt], vI[:, :, :Lt]], axis=2)
    x_mt_V = sdpa(qV[:, :, :Lt], kV[:, :, :Lt], vV[:, :, :Lt])
    x_mt_I = sdpa(qI[:, :, :Lt], kI[:, :, :Lt], vI[:, :, :Lt])
    x_s_V = sdpa(qV[:, :, Lt:],
                 jnp.concatenate([k_mt, kV[:, :, Lt:]], axis=2),
                 jnp.concatenate([v_mt, vV[:, :, Lt:]], axis=2))
    x_s_I = sdpa(qI[:, :, Lt:],
                 jnp.concatenate([k_mt, kI[:, :, Lt:]], axis=2),
                 jnp.concatenate([v_mt, vI[:, :, Lt:]], axis=2))
    x_V = jnp.concatenate([x_mt_V, x_s_V], axis=1)
    x_I = jnp.concatenate([x_mt_I, x_s_I], axis=1)
    attn_out = jnp.concatenate([x_V, x_I], axis=0) @ p['w_proj'] + p['b_proj']

    x_vi = x_vi + attn_out
    x2 = jnp.concatenate([ln(x_vi[:B], p['ln2_v_g'], p['ln2_v_b']),
                          ln(x_vi[B:], p['ln2_i_g'], p['ln2_i_b'])], axis=0)
    h = jax.nn.gelu(x2 @ p['w_fc1'] + p['b_fc1'], approximate=True)
    x_vi = x_vi + (h @ p['w_fc2'] + p['b_fc2'])
    return x_vi[:B], x_vi[B:]


# ---------------------------------------------------------------------------

if __name__ == "__main__":
    B = 2
    C = 64
    num_heads = 4          # head_dim = 16
    t_h = t_w = 4          # Lt = 4*4*2 = 32 template tokens
    s_h = s_w = 8          # Ls = 64 search tokens
    mlp_ratio = 4
    Lt = t_h * t_w * 2
    Ls = s_h * s_w
    N = Lt + Ls            # 96
    Ch = int(C * mlp_ratio)

    key = jax.random.PRNGKey(0)
    ks = jax.random.split(key, 16)
    x_v = jax.random.normal(ks[0], (B, N, C), jnp.float32)
    x_i = jax.random.normal(ks[1], (B, N, C), jnp.float32)

    params = {
        'ln1_v_g': 1.0 + 0.02 * jax.random.normal(ks[2], (C,), jnp.float32),
        'ln1_v_b': 0.02 * jax.random.normal(ks[3], (C,), jnp.float32),
        'ln1_i_g': 1.0 + 0.02 * jax.random.normal(ks[4], (C,), jnp.float32),
        'ln1_i_b': 0.02 * jax.random.normal(ks[5], (C,), jnp.float32),
        'w_qkv': 0.05 * jax.random.normal(ks[6], (C, 3 * C), jnp.float32),
        'b_qkv': jnp.zeros((3 * C,), jnp.float32),     # qkv_bias=False -> zero bias
        'w_proj': 0.05 * jax.random.normal(ks[7], (C, C), jnp.float32),
        'b_proj': 0.05 * jax.random.normal(ks[8], (C,), jnp.float32),
        'ln2_v_g': 1.0 + 0.02 * jax.random.normal(ks[9], (C,), jnp.float32),
        'ln2_v_b': 0.02 * jax.random.normal(ks[10], (C,), jnp.float32),
        'ln2_i_g': 1.0 + 0.02 * jax.random.normal(ks[11], (C,), jnp.float32),
        'ln2_i_b': 0.02 * jax.random.normal(ks[12], (C,), jnp.float32),
        'w_fc1': 0.05 * jax.random.normal(ks[13], (C, Ch), jnp.float32),
        'b_fc1': 0.05 * jax.random.normal(ks[14], (Ch,), jnp.float32),
        'w_fc2': 0.05 * jax.random.normal(ks[15], (Ch, C), jnp.float32),
        'b_fc2': jnp.zeros((C,), jnp.float32),
    }

    out_v, out_i = block_shared_forward(x_v, x_i, params,
                                        num_heads, t_h, t_w, s_h, s_w)
    jax.block_until_ready((out_v, out_i))

    ref_v, ref_i = block_shared_reference(x_v, x_i, params,
                                          num_heads, t_h, t_w, s_h, s_w)

    assert out_v.shape == (B, N, C) and out_i.shape == (B, N, C)
    # pl.reciprocal(approx=True) in the softmax introduces a small (~1e-4 rel)
    # deviation vs. the exact-division reference; tolerance reflects that.
    assert jnp.allclose(out_v, ref_v, atol=1e-2, rtol=1e-2), \
        f"max err V = {jnp.max(jnp.abs(out_v - ref_v))}"
    assert jnp.allclose(out_i, ref_i, atol=1e-2, rtol=1e-2), \
        f"max err I = {jnp.max(jnp.abs(out_i - ref_i))}"

    print("KERNEL_OK")
</pallas_src>

<mosaic_0001>
module attributes {stable_mosaic.version = 11 : i64} {
  func.func @kernel(%arg0: i32, %arg1: i32, %arg2: memref<1x192x64xf32, #tpu.memory_space<vmem>>, %arg3: memref<1x1x64xf32, #tpu.memory_space<vmem>>, %arg4: memref<1x1x64xf32, #tpu.memory_space<vmem>>, %arg5: memref<64x192xf32, #tpu.memory_space<vmem>>, %arg6: memref<1x192xf32, #tpu.memory_space<vmem>>, %arg7: memref<1x192x192xf32, #tpu.memory_space<vmem>>) attributes {dimension_semantics = [#tpu.dimension_semantics<parallel>, #tpu.dimension_semantics<parallel>], iteration_bounds = array<i64: 2, 1>, scalar_prefetch = 0 : i64, scratch_operands = 0 : i64, tpu.core_type = #tpu.core_type<tc>, window_params = [{transform_indices = @transform_0, window_bounds = array<i64: 1, 192, 64>}, {transform_indices = @transform_1, window_bounds = array<i64: 1, 1, 64>}, {transform_indices = @transform_2, window_bounds = array<i64: 1, 1, 64>}, {pipeline_mode = #tpu.pipeline_mode<synchronous>, transform_indices = @transform_3, window_bounds = array<i64: 64, 192>}, {pipeline_mode = #tpu.pipeline_mode<synchronous>, transform_indices = @transform_4, window_bounds = array<i64: 1, 192>}, {transform_indices = @transform_5, window_bounds = array<i64: 1, 192, 192>}]} {
    %c0 = arith.constant 0 : index
    %c0_0 = arith.constant 0 : index
    %c0_1 = arith.constant 0 : index
    %0 = vector.load %arg2[%c0, %c0_0, %c0_1] : memref<1x192x64xf32, #tpu.memory_space<vmem>>, vector<1x192x64xf32>
    %1 = vector.shape_cast %0 : vector<1x192x64xf32> to vector<192x64xf32>
    %cst = arith.constant dense<0.000000e+00> : vector<192xf32>
    %2 = vector.multi_reduction <add>, %1, %cst [1] : vector<192x64xf32> to vector<192xf32>
    %3 = vector.shape_cast %2 : vector<192xf32> to vector<192x1xf32>
    %cst_2 = arith.constant 6.400000e+01 : f32
    %4 = vector.broadcast %cst_2 : f32 to vector<192x1xf32>
    %5 = arith.divf %3, %4 : vector<192x1xf32>
    %6 = vector.broadcast %5 : vector<192x1xf32> to vector<192x64xf32>
    %7 = arith.subf %1, %6 : vector<192x64xf32>
    %8 = arith.mulf %7, %7 : vector<192x64xf32>
    %cst_3 = arith.constant dense<0.000000e+00> : vector<192xf32>
    %9 = vector.multi_reduction <add>, %8, %cst_3 [1] : vector<192x64xf32> to vector<192xf32>
    %10 = vector.shape_cast %9 : vector<192xf32> to vector<192x1xf32>
    %cst_4 = arith.constant 6.400000e+01 : f32
    %11 = vector.broadcast %cst_4 : f32 to vector<192x1xf32>
    %12 = arith.divf %10, %11 : vector<192x1xf32>
    %cst_5 = arith.constant 9.99999974E-6 : f32
    %13 = vector.broadcast %cst_5 : f32 to vector<192x1xf32>
    %14 = arith.addf %12, %13 : vector<192x1xf32>
    %15 = math.rsqrt %14 : vector<192x1xf32>
    %16 = vector.broadcast %15 : vector<192x1xf32> to vector<192x64xf32>
    %17 = arith.mulf %7, %16 : vector<192x64xf32>
    %c0_6 = arith.constant 0 : index
    %c0_7 = arith.constant 0 : index
    %c0_8 = arith.constant 0 : index
    %18 = vector.load %arg3[%c0_6, %c0_7, %c0_8] : memref<1x1x64xf32, #tpu.memory_space<vmem>>, vector<1x1x64xf32>
    %19 = vector.shape_cast %18 : vector<1x1x64xf32> to vector<1x64xf32>
    %20 = vector.broadcast %19 : vector<1x64xf32> to vector<192x64xf32>
    %21 = arith.mulf %17, %20 : vector<192x64xf32>
    %c0_9 = arith.constant 0 : index
    %c0_10 = arith.constant 0 : index
    %c0_11 = arith.constant 0 : index
    %22 = vector.load %arg4[%c0_9, %c0_10, %c0_11] : memref<1x1x64xf32, #tpu.memory_space<vmem>>, vector<1x1x64xf32>
    %23 = vector.shape_cast %22 : vector<1x1x64xf32> to vector<1x64xf32>
    %24 = vector.broadcast %23 : vector<1x64xf32> to vector<192x64xf32>
    %25 = arith.addf %21, %24 : vector<192x64xf32>
    %c0_12 = arith.constant 0 : index
    %c0_13 = arith.constant 0 : index
    %26 = vector.load %arg5[%c0_12, %c0_13] : memref<64x192xf32, #tpu.memory_space<vmem>>, vector<64x192xf32>
    %cst_14 = arith.constant dense<0.000000e+00> : vector<192x192xf32>
    %27 = tpu.matmul %25, %26, %cst_14 {dimension_numbers = #tpu.dot_dimension_numbers<[1], [0], [0], [1], [0, 0, 1, 1], [], []>} : vector<192x64xf32>, vector<64x192xf32>, vector<192x192xf32> -> vector<192x192xf32>
    %c0_15 = arith.constant 0 : index
    %c0_16 = arith.constant 0 : index
    %28 = vector.load %arg6[%c0_15, %c0_16] : memref<1x192xf32, #tpu.memory_space<vmem>>, vector<1x192xf32>
    %29 = vector.broadcast %28 : vector<1x192xf32> to vector<192x192xf32>
    %30 = arith.addf %27, %29 : vector<192x192xf32>
    %c0_17 = arith.constant 0 : index
    %c0_18 = arith.constant 0 : index
    %c0_19 = arith.constant 0 : index
    %31 = vector.load %arg7[%c0_17, %c0_18, %c0_19] : memref<1x192x192xf32, #tpu.memory_space<vmem>>, vector<1x192x192xf32>
    %32 = vector.shape_cast %31 : vector<1x192x192xf32> to vector<192x192xf32>
    %33 = vector.shape_cast %30 : vector<192x192xf32> to vector<1x192x192xf32>
    tpu.vector_store %arg7[%c0_17, %c0_18, %c0_19], %33 {strides = array<i32>} : memref<1x192x192xf32, #tpu.memory_space<vmem>>, vector<1x192x192xf32>,
    return
  }
  func.func @transform_0(%arg0: i32, %arg1: i32) -> (i32, i32, i32) {
    %c0_i32 = arith.constant 0 : i32
    %c0_i32_0 = arith.constant 0 : i32
    return %arg0, %arg1, %c0_i32 : i32, i32, i32
  }
  func.func @transform_1(%arg0: i32, %arg1: i32) -> (i32, i32, i32) {
    %c0_i32 = arith.constant 0 : i32
    %c0_i32_0 = arith.constant 0 : i32
    %c0_i32_1 = arith.constant 0 : i32
    return %arg0, %c0_i32, %c0_i32_0 : i32, i32, i32
  }
  func.func @transform_2(%arg0: i32, %arg1: i32) -> (i32, i32, i32) {
    %c0_i32 = arith.constant 0 : i32
    %c0_i32_0 = arith.constant 0 : i32
    %c0_i32_1 = arith.constant 0 : i32
    return %arg0, %c0_i32, %c0_i32_0 : i32, i32, i32
  }
  func.func @transform_3(%arg0: i32, %arg1: i32) -> (i32, i32) {
    %c0_i32 = arith.constant 0 : i32
    %c0_i32_0 = arith.constant 0 : i32
    %c0_i32_1 = arith.constant 0 : i32
    return %c0_i32, %c0_i32_0 : i32, i32
  }
  func.func @transform_4(%arg0: i32, %arg1: i32) -> (i32, i32) {
    %c0_i32 = arith.constant 0 : i32
    %c0_i32_0 = arith.constant 0 : i32
    %c0_i32_1 = arith.constant 0 : i32
    return %c0_i32, %c0_i32_0 : i32, i32
  }
  func.func @transform_5(%arg0: i32, %arg1: i32) -> (i32, i32, i32) {
    %c0_i32 = arith.constant 0 : i32
    %c0_i32_0 = arith.constant 0 : i32
    return %arg0, %arg1, %c0_i32 : i32, i32, i32
  }
}

</mosaic_0001>

<llo_original>
// kernel: tpu_custom_call.1
$region0: #{tpu_custom_call.1}
  #allocation0 [shape = 'u32[]', space=smem, size = 0x4, offset = 0x4, fixed_abs, tag = 'smem constant byte address 0x4 - core index']
  #allocation1 [shape = 'u32[144,128]{1,0:T(1,128)}', space=vmem, size = 0x12000, scoped, tag = 'internal scratch']
  %s0 = inlined_call_operand.vmem [shape: f32[2,192,64], index: 0, kind: input, shape index: {}]
  %s1 = inlined_call_operand.vmem [shape: f32[2,1,64], index: 1, kind: input, shape index: {}]
  %s2 = inlined_call_operand.vmem [shape: f32[2,1,64], index: 2, kind: input, shape index: {}]
  %s3 = inlined_call_operand.vmem [shape: f32[64,192], index: 3, kind: input, shape index: {}]
  %s4 = inlined_call_operand.vmem [shape: f32[1,192], index: 4, kind: input, shape index: {}]
  %s5 = inlined_call_operand.hbm [shape: f32[2,192,192], index: 5, kind: output, shape index: {}]
  %s6 = sld [smem:[#allocation0]]
  $region53: #{tpu_custom_call.1} parent=0
    _
  %s8 = ssub.s32 1, %s6
  %s9 = scalar_select 0, %s8, %s6
  $region1: #{tpu_custom_call.1} parent=0
    #allocation2 [shape = 'u8[393216]{0}', space=vmem, size = 0x60000, scoped, tag = 'output window, operand 0']
    #allocation3 [shape = 's32[2]{0}', space=sflag, size = 0x8, scoped, tag = 'scoped memory for tpu_custom_call.1']
    %10 = vsyncpa [#allocation3], 0
    %s11 = scalar_lea.sflag [#allocation3], 1
    %12 = vsyncpa %s11, 0
    loop: start=0, step=1, limit=4
    $region2: #{tpu_custom_call.1} parent=1 // loop_pre_header
      _
    $region3: #{tpu_custom_call.1} parent=1 // loop_header
      %s14 = sphi 0, %s18
      %p15 = scmp.ge.s32.totalorder %s14, 4
      %s21 = sphi 0, %s33
      %s22 = sphi 0, %s29
      %s23 = sphi 0, %s21
      %s24 = sphi 0, %s22
      %s25 = sphi 0, %s23
      %s26 = sphi 0, %s24
      %s38 = sphi 0, %s40
      %s41 = sphi 0, %s38
      %s42 = sphi 0, %s41
      %s58 = sphi 0, %s42
      %s64 = sphi 0, %s66
      %s67 = sphi 0, %s64
      %s68 = sphi 0, %s67
      %s84 = sphi 0, %s68
      %s90 = sphi 0, %s92
      %s93 = sphi 0, %s90
      %s94 = sphi 0, %s93
      %s110 = sphi 0, %s94
      %s114 = sphi 0, %s114
      %s116 = sphi 0, %s114
      %s117 = sphi 0, %s116
      %s131 = sphi 0, %s117
      %s135 = sphi 0, %s135
      %s137 = sphi 0, %s135
      %s138 = sphi 0, %s137
      %s152 = sphi 0, %s138
      %s160 = sphi 0, %s162
      %s163 = sphi 0, %s160
      %s164 = sphi 0, %s163
      %s180 = sphi 0, %s164
    $region4: #{tpu_custom_call.1} parent=1 // loop_header_branch
      %17 = sbr.rel (%p15) target = $region8
    $region5: #{tpu_custom_call.1} parent=1 // loop_body
      %s19 = ssub.s32 %s14, 1
      %s20 = ssub.s32 %s14, 2
      %s27 = sadd.s32 1, %s22
      %p28 = scmp.ge.s32.totalorder %s27, 1
      %s29 = scalar_select %p28, 0, %s27
      %s30 = sadd.s32 1, %s21
      %s31 = scalar_select %p28, %s30, %s21
      %p32 = scmp.ge.s32.totalorder %s31, 2
      %s33 = scalar_select %p32, 0, %s31
      %s34 = ssub.s32 %s21, %s33
      %s35 = ssub.s32 %s22, %s29
      %s36 = sor.u32 %s34, %s35
      %p37 = scmp.eq.s32.totalorder %s36, 0
      %s39 = sadd.s32 %s38, 1
      %s40 = scalar_select %p37, %s38, %s39
      %p43 = pneg %p37
      %p44 = scmp.eq.s32.totalorder %s14, 1
      %p45 = por %p43, %p44
      %p46 = scmp.ne.s32.totalorder %s38, %s41
      %p47 = scmp.eq.s32.totalorder %s14, 0
      %p48 = por %p46, %p47
      %p49 = scmp.ne.s32.totalorder %s38, %s41
      %p50 = scmp.eq.s32.totalorder %s19, 1
      %p51 = por %p49, %p50
      %p52 = scmp.ne.s32.totalorder %s41, %s42
      %p53 = scmp.eq.s32.totalorder %s19, 0
      %p54 = por %p52, %p53
      %p55 = scmp.ne.s32.totalorder %s41, %s42
      %p56 = scmp.eq.s32.totalorder %s20, 1
      %p57 = por %p55, %p56
      %p59 = scmp.ne.s32.totalorder %s42, %s58
      %p60 = scmp.eq.s32.totalorder %s20, 0
      %p61 = por %p59, %p60
      %s62 = ssub.s32 %s21, %s33
      %p63 = scmp.eq.s32.totalorder %s62, 0
      %s65 = sadd.s32 %s64, 1
      %s66 = scalar_select %p63, %s64, %s65
      %p69 = pneg %p63
      %p70 = scmp.eq.s32.totalorder %s14, 1
      %p71 = por %p69, %p70
      %p72 = scmp.ne.s32.totalorder %s64, %s67
      %p73 = scmp.eq.s32.totalorder %s14, 0
      %p74 = por %p72, %p73
      %p75 = scmp.ne.s32.totalorder %s64, %s67
      %p76 = scmp.eq.s32.totalorder %s19, 1
      %p77 = por %p75, %p76
      %p78 = scmp.ne.s32.totalorder %s67, %s68
      %p79 = scmp.eq.s32.totalorder %s19, 0
      %p80 = por %p78, %p79
      %p81 = scmp.ne.s32.totalorder %s67, %s68
      %p82 = scmp.eq.s32.totalorder %s20, 1
      %p83 = por %p81, %p82
      %p85 = scmp.ne.s32.totalorder %s68, %s84
      %p86 = scmp.eq.s32.totalorder %s20, 0
      %p87 = por %p85, %p86
      %s88 = ssub.s32 %s21, %s33
      %p89 = scmp.eq.s32.totalorder %s88, 0
      %s91 = sadd.s32 %s90, 1
      %s92 = scalar_select %p89, %s90, %s91
      %p95 = pneg %p89
      %p96 = scmp.eq.s32.totalorder %s14, 1
      %p97 = por %p95, %p96
      %p98 = scmp.ne.s32.totalorder %s90, %s93
      %p99 = scmp.eq.s32.totalorder %s14, 0
      %p100 = por %p98, %p99
      %p101 = scmp.ne.s32.totalorder %s90, %s93
      %p102 = scmp.eq.s32.totalorder %s19, 1
      %p103 = por %p101, %p102
      %p104 = scmp.ne.s32.totalorder %s93, %s94
      %p105 = scmp.eq.s32.totalorder %s19, 0
      %p106 = por %p104, %p105
      %p107 = scmp.ne.s32.totalorder %s93, %s94
      %p108 = scmp.eq.s32.totalorder %s20, 1
      %p109 = por %p107, %p108
      %p111 = scmp.ne.s32.totalorder %s94, %s110
      %p112 = scmp.eq.s32.totalorder %s20, 0
      %p113 = por %p111, %p112
      %s115 = sadd.s32 %s114, 1
      %p118 = scmp.eq.s32.totalorder %s14, 1
      %p119 = scmp.ne.s32.totalorder %s114, %s116
      %p120 = scmp.eq.s32.totalorder %s14, 0
      %p121 = por %p119, %p120
      %p122 = scmp.ne.s32.totalorder %s114, %s116
      %p123 = scmp.eq.s32.totalorder %s19, 1
      %p124 = por %p122, %p123
      %p125 = scmp.ne.s32.totalorder %s116, %s117
      %p126 = scmp.eq.s32.totalorder %s19, 0
      %p127 = por %p125, %p126
      %p128 = scmp.ne.s32.totalorder %s116, %s117
      %p129 = scmp.eq.s32.totalorder %s20, 1
      %p130 = por %p128, %p129
      %p132 = scmp.ne.s32.totalorder %s117, %s131
      %p133 = scmp.eq.s32.totalorder %s20, 0
      %p134 = por %p132, %p133
      %s136 = sadd.s32 %s135, 1
      %p139 = scmp.eq.s32.totalorder %s14, 1
      %p140 = scmp.ne.s32.totalorder %s135, %s137
      %p141 = scmp.eq.s32.totalorder %s14, 0
      %p142 = por %p140, %p141
      %p143 = scmp.ne.s32.totalorder %s135, %s137
      %p144 = scmp.eq.s32.totalorder %s19, 1
      %p145 = por %p143, %p144
      %p146 = scmp.ne.s32.totalorder %s137, %s138
      %p147 = scmp.eq.s32.totalorder %s19, 0
      %p148 = por %p146, %p147
      %p149 = scmp.ne.s32.totalorder %s137, %s138
      %p150 = scmp.eq.s32.totalorder %s20, 1
      %p151 = por %p149, %p150
      %p153 = scmp.ne.s32.totalorder %s138, %s152
      %p154 = scmp.eq.s32.totalorder %s20, 0
      %p155 = por %p153, %p154
      %s156 = ssub.s32 %s21, %s33
      %s157 = ssub.s32 %s22, %s29
      %s158 = sor.u32 %s156, %s157
      %p159 = scmp.eq.s32.totalorder %s158, 0
      %s161 = sadd.s32 %s160, 1
      %s162 = scalar_select %p159, %s160, %s161
      %p165 = pneg %p159
      %p166 = scmp.eq.s32.totalorder %s14, 1
      %p167 = por %p165, %p166
      %p168 = scmp.ne.s32.totalorder %s160, %s163
      %p169 = scmp.eq.s32.totalorder %s14, 0
      %p170 = por %p168, %p169
      %p171 = scmp.ne.s32.totalorder %s160, %s163
      %p172 = scmp.eq.s32.totalorder %s19, 1
      %p173 = por %p171, %p172
      %p174 = scmp.ne.s32.totalorder %s163, %s164
      %p175 = scmp.eq.s32.totalorder %s19, 0
      %p176 = por %p174, %p175
      %p177 = scmp.ne.s32.totalorder %s163, %s164
      %p178 = scmp.eq.s32.totalorder %s20, 1
      %p179 = por %p177, %p178
      %p181 = scmp.ne.s32.totalorder %s164, %s180
      %p182 = scmp.eq.s32.totalorder %s20, 0
      %p183 = por %p181, %p182
      %p184 = scmp.le.s32.totalorder 1, %s14
      %p185 = scmp.lt.s32.totalorder %s14, 3
      %p186 = pnand %p184, %p185
      %p187 = pneg %p186
      // Predicated region
      $region9: #{tpu_custom_call.1} parent=5 // pred_check
        _
      $region10: #{tpu_custom_call.1} parent=5 // pred_check_branch
        %189 = sbr.rel (%p186) target = $region12
      $region11: #{tpu_custom_call.1} parent=5 // pred_region
        %s190 = ssub.s32 %s14, 1
        // Predicated region
        $region13: #{tpu_custom_call.1} parent=11 // pred_check
          %p191 = pneg %p127
        $region14: #{tpu_custom_call.1} parent=11 // pred_check_branch
          %193 = sbr.rel (%p191) target = $region16
        $region15: #{tpu_custom_call.1} parent=11 // pred_region
          _
        $region16: #{tpu_custom_call.1} parent=11 // pred_fallthru
          _
        // Predicated region
        $region17: #{tpu_custom_call.1} parent=11 // pred_check
          %p194 = pneg %p148
        $region18: #{tpu_custom_call.1} parent=11 // pred_check_branch
          %196 = sbr.rel (%p194) target = $region20
        $region19: #{tpu_custom_call.1} parent=11 // pred_region
          _
        $region20: #{tpu_custom_call.1} parent=11 // pred_fallthru
          _
      $region12: #{tpu_custom_call.1} parent=5 // pred_fallthru
        _
      %p197 = scmp.lt.s32.totalorder %s14, 2
      // Predicated region
      $region21: #{tpu_custom_call.1} parent=5 // pred_check
        %p198 = pneg %p197
      $region22: #{tpu_custom_call.1} parent=5 // pred_check_branch
        %200 = sbr.rel (%p198) target = $region24
      $region23: #{tpu_custom_call.1} parent=5 // pred_region
        // Predicated region
        $region25: #{tpu_custom_call.1} parent=23 // pred_check
          %p201 = pneg %p48
        $region26: #{tpu_custom_call.1} parent=23 // pred_check_branch
          %203 = sbr.rel (%p201) target = $region28
        $region27: #{tpu_custom_call.1} parent=23 // pred_region
          %s204 = smul.u32 24, %s22
          %p205 = scmp.lt.s32.totalorder %s21, 1
          %s206 = scalar_select %p205, %s21, 1
          %p207 = scmp.lt.s32.totalorder %s204, 23
          %s208 = scalar_select %p207, %s204, 23
          %s209 = smul.addr %s206, 24
          %s210 = sadd.s32 %s208, %s209
          %s211 = smul.addr %s210, 8
          %s212 = scalar_lea.vmem %s0, %s211
          %s213 = smul.u32 24, %s22
        $region28: #{tpu_custom_call.1} parent=23 // pred_fallthru
          _
        // Predicated region
        $region29: #{tpu_custom_call.1} parent=23 // pred_check
          %p214 = pneg %p74
        $region30: #{tpu_custom_call.1} parent=23 // pred_check_branch
          %216 = sbr.rel (%p214) target = $region32
        $region31: #{tpu_custom_call.1} parent=23 // pred_region
          %p217 = scmp.lt.s32.totalorder %s21, 1
          %s218 = scalar_select %p217, %s21, 1
          %s219 = scalar_lea.vmem %s1, %s218
        $region32: #{tpu_custom_call.1} parent=23 // pred_fallthru
          _
        // Predicated region
        $region33: #{tpu_custom_call.1} parent=23 // pred_check
          %p220 = pneg %p100
        $region34: #{tpu_custom_call.1} parent=23 // pred_check_branch
          %222 = sbr.rel (%p220) target = $region36
        $region35: #{tpu_custom_call.1} parent=23 // pred_region
          %p223 = scmp.lt.s32.totalorder %s21, 1
          %s224 = scalar_select %p223, %s21, 1
          %s225 = scalar_lea.vmem %s2, %s224
        $region36: #{tpu_custom_call.1} parent=23 // pred_fallthru
          _
      $region24: #{tpu_custom_call.1} parent=5 // pred_fallthru
        _
      %p226 = scmp.le.s32.totalorder 1, %s14
      %p227 = scmp.lt.s32.totalorder %s14, 3
      %p228 = pnand %p226, %p227
      %p229 = pneg %p228
      // Predicated region
      $region37: #{tpu_custom_call.1} parent=5 // pred_check
        _
      $region38: #{tpu_custom_call.1} parent=5 // pred_check_branch
        %231 = sbr.rel (%p228) target = $region40
      $region39: #{tpu_custom_call.1} parent=5 // pred_region
        %s232 = ssub.s32 %s14, 1
        %s233 = smul.u32 24, %s24
        %p234 = scmp.lt.s32.totalorder %s23, 1
        %s235 = scalar_select %p234, %s23, 1
        %p236 = scmp.lt.s32.totalorder %s233, 23
        %s237 = scalar_select %p236, %s233, 23
        %s238 = smul.addr %s235, 24
        %s239 = sadd.s32 %s237, %s238
        %s240 = smul.addr %s239, 8
        %s241 = scalar_lea.vmem %s0, %s240
        %p242 = pneg %p54
        %p243 = pneg %p51
        %p244 = scmp.lt.s32.totalorder %s23, 1
        %s245 = scalar_select %p244, %s23, 1
        %s246 = scalar_lea.vmem %s1, %s245
        %p247 = pneg %p80
        %p248 = pneg %p77
        %p249 = scmp.lt.s32.totalorder %s23, 1
        %s250 = scalar_select %p249, %s23, 1
        %s251 = scalar_lea.vmem %s2, %s250
        %p252 = pneg %p106
        %p253 = pneg %p103
        %p254 = pneg %p127
        %p255 = pneg %p124
        %p256 = pneg %p148
        %p257 = pneg %p145
        %p258 = pneg %p176
        %p259 = pneg %p173
        %s260 = sand.u32 %s163, 1
        %s261 = scalar_lea.sflag [#allocation3], %s260
        %s262 = sand.u32 %s163, 1
        %s263 = smul.addr %s262, 384
        %s264 = scalar_lea.vmem [#allocation2], %s263
        %s265 = smul.u32 24, %s24
        %p266 = scmp.lt.s32.totalorder %s23, 1
        %s267 = scalar_select %p266, %s23, 1
        %p268 = scmp.lt.s32.totalorder %s265, 23
        %s269 = scalar_select %p268, %s265, 23
        %s270 = smul.addr %s267, 24
        %s271 = sadd.s32 %s269, %s270
        %s272 = smul.addr %s271, 8
        %s273 = scalar_lea.vmem %s0, %s272
        %s274 = smul.u32 24, %s24
        %p275 = scmp.lt.s32.totalorder %s23, 1
        %s276 = scalar_select %p275, %s23, 1
        %s277 = scalar_lea.vmem %s1, %s276
        %p278 = scmp.lt.s32.totalorder %s23, 1
        %s279 = scalar_select %p278, %s23, 1
        %s280 = scalar_lea.vmem %s2, %s279
        %s281 = smul.u32 24, %s24
        %v282 = vld [vmem:[%s273] sm:$0xff]
        %v283 = vld [vmem:[%s273 + $0x8] sm:$0xff]
        %v284 = vld [vmem:[%s273 + $0x10] sm:$0xff]
        %v285 = vld [vmem:[%s273 + $0x18] sm:$0xff]
        %v286 = vld [vmem:[%s273 + $0x20] sm:$0xff]
        %v287 = vld [vmem:[%s273 + $0x28] sm:$0xff]
        %v288 = vld [vmem:[%s273 + $0x30] sm:$0xff]
        %v289 = vld [vmem:[%s273 + $0x38] sm:$0xff]
        %v290 = vld [vmem:[%s273 + $0x40] sm:$0xff]
        %v291 = vld [vmem:[%s273 + $0x48] sm:$0xff]
        %v292 = vld [vmem:[%s273 + $0x50] sm:$0xff]
        %v293 = vld [vmem:[%s273 + $0x58] sm:$0xff]
        %v294 = vld [vmem:[%s273 + $0x60] sm:$0xff]
        %v295 = vld [vmem:[%s273 + $0x68] sm:$0xff]
        %v296 = vld [vmem:[%s273 + $0x70] sm:$0xff]
        %v297 = vld [vmem:[%s273 + $0x78] sm:$0xff]
        %v298 = vld [vmem:[%s273 + $0x80] sm:$0xff]
        %v299 = vld [vmem:[%s273 + $0x88] sm:$0xff]
        %v300 = vld [vmem:[%s273 + $0x90] sm:$0xff]
        %v301 = vld [vmem:[%s273 + $0x98] sm:$0xff]
        %v302 = vld [vmem:[%s273 + $0xa0] sm:$0xff]
        %v303 = vld [vmem:[%s273 + $0xa8] sm:$0xff]
        %v304 = vld [vmem:[%s273 + $0xb0] sm:$0xff]
        %v305 = vld [vmem:[%s273 + $0xb8] sm:$0xff]
        %vm306 = vcmask 523264
        %v307 = vsel %vm306, %v282, 0.0
        %308 = vadd.xlane.f32.xlu0 %v307
        %v309 = vpop.xlane.xlu0 %308
        %v310 = vsel %vm306, %v283, 0.0
        %311 = vadd.xlane.f32.xlu0 %v310
        %v312 = vpop.xlane.xlu0 %311
        %v313 = vsel %vm306, %v284, 0.0
        %314 = vadd.xlane.f32.xlu0 %v313
        %v315 = vpop.xlane.xlu0 %314
        %v316 = vsel %vm306, %v285, 0.0
        %317 = vadd.xlane.f32.xlu0 %v316
        %v318 = vpop.xlane.xlu0 %317
        %v319 = vsel %vm306, %v286, 0.0
        %320 = vadd.xlane.f32.xlu0 %v319
        %v321 = vpop.xlane.xlu0 %320
        %v322 = vsel %vm306, %v287, 0.0
        %323 = vadd.xlane.f32.xlu0 %v322
        %v324 = vpop.xlane.xlu0 %323
        %v325 = vsel %vm306, %v288, 0.0
        %326 = vadd.xlane.f32.xlu0 %v325
        %v327 = vpop.xlane.xlu0 %326
        %v328 = vsel %vm306, %v289, 0.0
        %329 = vadd.xlane.f32.xlu0 %v328
        %v330 = vpop.xlane.xlu0 %329
        %v331 = vsel %vm306, %v290, 0.0
        %332 = vadd.xlane.f32.xlu0 %v331
        %v333 = vpop.xlane.xlu0 %332
        %v334 = vsel %vm306, %v291, 0.0
        %335 = vadd.xlane.f32.xlu0 %v334
        %v336 = vpop.xlane.xlu0 %335
        %v337 = vsel %vm306, %v292, 0.0
        %338 = vadd.xlane.f32.xlu0 %v337
        %v339 = vpop.xlane.xlu0 %338
        %v340 = vsel %vm306, %v293, 0.0
        %341 = vadd.xlane.f32.xlu0 %v340
        %v342 = vpop.xlane.xlu0 %341
        %v343 = vsel %vm306, %v294, 0.0
        %344 = vadd.xlane.f32.xlu0 %v343
        %v345 = vpop.xlane.xlu0 %344
        %v346 = vsel %vm306, %v295, 0.0
        %347 = vadd.xlane.f32.xlu0 %v346
        %v348 = vpop.xlane.xlu0 %347
        %v349 = vsel %vm306, %v296, 0.0
        %350 = vadd.xlane.f32.xlu0 %v349
        %v351 = vpop.xlane.xlu0 %350
        %v352 = vsel %vm306, %v297, 0.0
        %353 = vadd.xlane.f32.xlu0 %v352
        %v354 = vpop.xlane.xlu0 %353
        %v355 = vsel %vm306, %v298, 0.0
        %356 = vadd.xlane.f32.xlu0 %v355
        %v357 = vpop.xlane.xlu0 %356
        %v358 = vsel %vm306, %v299, 0.0
        %359 = vadd.xlane.f32.xlu0 %v358
        %v360 = vpop.xlane.xlu0 %359
        %v361 = vsel %vm306, %v300, 0.0
        %362 = vadd.xlane.f32.xlu0 %v361
        %v363 = vpop.xlane.xlu0 %362
        %v364 = vsel %vm306, %v301, 0.0
        %365 = vadd.xlane.f32.xlu0 %v364
        %v366 = vpop.xlane.xlu0 %365
        %v367 = vsel %vm306, %v302, 0.0
        %368 = vadd.xlane.f32.xlu0 %v367
        %v369 = vpop.xlane.xlu0 %368
        %v370 = vsel %vm306, %v303, 0.0
        %371 = vadd.xlane.f32.xlu0 %v370
        %v372 = vpop.xlane.xlu0 %371
        %v373 = vsel %vm306, %v304, 0.0
        %374 = vadd.xlane.f32.xlu0 %v373
        %v375 = vpop.xlane.xlu0 %374
        %v376 = vsel %vm306, %v305, 0.0
        %377 = vadd.xlane.f32.xlu0 %v376
        %v378 = vpop.xlane.xlu0 %377
        %v379 = vrcp.pop 64.0
        %v380 = vmul.f32 %v309, %v379
        %v381 = vmul.f32 %v312, %v379
        %v382 = vmul.f32 %v315, %v379
        %v383 = vmul.f32 %v318, %v379
        %v384 = vmul.f32 %v321, %v379
        %v385 = vmul.f32 %v324, %v379
        %v386 = vmul.f32 %v327, %v379
        %v387 = vmul.f32 %v330, %v379
        %v388 = vmul.f32 %v333, %v379
        %v389 = vmul.f32 %v336, %v379
        %v390 = vmul.f32 %v339, %v379
        %v391 = vmul.f32 %v342, %v379
        %v392 = vmul.f32 %v345, %v379
        %v393 = vmul.f32 %v348, %v379
        %v394 = vmul.f32 %v351, %v379
        %v395 = vmul.f32 %v354, %v379
        %v396 = vmul.f32 %v357, %v379
        %v397 = vmul.f32 %v360, %v379
        %v398 = vmul.f32 %v363, %v379
        %v399 = vmul.f32 %v366, %v379
        %v400 = vmul.f32 %v369, %v379
        %v401 = vmul.f32 %v372, %v379
        %v402 = vmul.f32 %v375, %v379
        %v403 = vmul.f32 %v378, %v379
        %v404 = vsub.f32 %v282, %v380
        %v405 = vsub.f32 %v283, %v381
        %v406 = vsub.f32 %v284, %v382
        %v407 = vsub.f32 %v285, %v383
        %v408 = vsub.f32 %v286, %v384
        %v409 = vsub.f32 %v287, %v385
        %v410 = vsub.f32 %v288, %v386
        %v411 = vsub.f32 %v289, %v387
        %v412 = vsub.f32 %v290, %v388
        %v413 = vsub.f32 %v291, %v389
        %v414 = vsub.f32 %v292, %v390
        %v415 = vsub.f32 %v293, %v391
        %v416 = vsub.f32 %v294, %v392
        %v417 = vsub.f32 %v295, %v393
        %v418 = vsub.f32 %v296, %v394
        %v419 = vsub.f32 %v297, %v395
        %v420 = vsub.f32 %v298, %v396
        %v421 = vsub.f32 %v299, %v397
        %v422 = vsub.f32 %v300, %v398
        %v423 = vsub.f32 %v301, %v399
        %v424 = vsub.f32 %v302, %v400
        %v425 = vsub.f32 %v303, %v401
        %v426 = vsub.f32 %v304, %v402
        %v427 = vsub.f32 %v305, %v403
        %v428 = vmul.f32 %v404, %v404
        %v429 = vmul.f32 %v405, %v405
        %v430 = vmul.f32 %v406, %v406
        %v431 = vmul.f32 %v407, %v407
        %v432 = vmul.f32 %v408, %v408
        %v433 = vmul.f32 %v409, %v409
        %v434 = vmul.f32 %v410, %v410
        %v435 = vmul.f32 %v411, %v411
        %v436 = vmul.f32 %v412, %v412
        %v437 = vmul.f32 %v413, %v413
        %v438 = vmul.f32 %v414, %v414
        %v439 = vmul.f32 %v415, %v415
        %v440 = vmul.f32 %v416, %v416
        %v441 = vmul.f32 %v417, %v417
        %v442 = vmul.f32 %v418, %v418
        %v443 = vmul.f32 %v419, %v419
        %v444 = vmul.f32 %v420, %v420
        %v445 = vmul.f32 %v421, %v421
        %v446 = vmul.f32 %v422, %v422
        %v447 = vmul.f32 %v423, %v423
        %v448 = vmul.f32 %v424, %v424
        %v449 = vmul.f32 %v425, %v425
        %v450 = vmul.f32 %v426, %v426
        %v451 = vmul.f32 %v427, %v427
        %v452 = vsel %vm306, %v428, 0.0
        %453 = vadd.xlane.f32.xlu0 %v452
        %v454 = vpop.xlane.xlu0 %453
        %v455 = vsel %vm306, %v429, 0.0
        %456 = vadd.xlane.f32.xlu0 %v455
        %v457 = vpop.xlane.xlu0 %456
        %v458 = vsel %vm306, %v430, 0.0
        %459 = vadd.xlane.f32.xlu0 %v458
        %v460 = vpop.xlane.xlu0 %459
        %v461 = vsel %vm306, %v431, 0.0
        %462 = vadd.xlane.f32.xlu0 %v461
        %v463 = vpop.xlane.xlu0 %462
        %v464 = vsel %vm306, %v432, 0.0
        %465 = vadd.xlane.f32.xlu0 %v464
        %v466 = vpop.xlane.xlu0 %465
        %v467 = vsel %vm306, %v433, 0.0
        %468 = vadd.xlane.f32.xlu0 %v467
        %v469 = vpop.xlane.xlu0 %468
        %v470 = vsel %vm306, %v434, 0.0
        %471 = vadd.xlane.f32.xlu0 %v470
        %v472 = vpop.xlane.xlu0 %471
        %v473 = vsel %vm306, %v435, 0.0
        %474 = vadd.xlane.f32.xlu0 %v473
        %v475 = vpop.xlane.xlu0 %474
        %v476 = vsel %vm306, %v436, 0.0
        %477 = vadd.xlane.f32.xlu0 %v476
        %v478 = vpop.xlane.xlu0 %477
        %v479 = vsel %vm306, %v437, 0.0
        %480 = vadd.xlane.f32.xlu0 %v479
        %v481 = vpop.xlane.xlu0 %480
        %v482 = vsel %vm306, %v438, 0.0
        %483 = vadd.xlane.f32.xlu0 %v482
        %v484 = vpop.xlane.xlu0 %483
        %v485 = vsel %vm306, %v439, 0.0
        %486 = vadd.xlane.f32.xlu0 %v485
        %v487 = vpop.xlane.xlu0 %486
        %v488 = vsel %vm306, %v440, 0.0
        %489 = vadd.xlane.f32.xlu0 %v488
        %v490 = vpop.xlane.xlu0 %489
        %v491 = vsel %vm306, %v441, 0.0
        %492 = vadd.xlane.f32.xlu0 %v491
        %v493 = vpop.xlane.xlu0 %492
        %v494 = vsel %vm306, %v442, 0.0
        %495 = vadd.xlane.f32.xlu0 %v494
        %v496 = vpop.xlane.xlu0 %495
        %v497 = vsel %vm306, %v443, 0.0
        %498 = vadd.xlane.f32.xlu0 %v497
        %v499 = vpop.xlane.xlu0 %498
        %v500 = vsel %vm306, %v444, 0.0
        %501 = vadd.xlane.f32.xlu0 %v500
        %v502 = vpop.xlane.xlu0 %501
        %v503 = vsel %vm306, %v445, 0.0
        %504 = vadd.xlane.f32.xlu0 %v503
        %v505 = vpop.xlane.xlu0 %504
        %v506 = vsel %vm306, %v446, 0.0
        %507 = vadd.xlane.f32.xlu0 %v506
        %v508 = vpop.xlane.xlu0 %507
        %v509 = vsel %vm306, %v447, 0.0
        %510 = vadd.xlane.f32.xlu0 %v509
        %v511 = vpop.xlane.xlu0 %510
        %v512 = vsel %vm306, %v448, 0.0
        %513 = vadd.xlane.f32.xlu0 %v512
        %v514 = vpop.xlane.xlu0 %513
        %v515 = vsel %vm306, %v449, 0.0
        %516 = vadd.xlane.f32.xlu0 %v515
        %v517 = vpop.xlane.xlu0 %516
        %v518 = vsel %vm306, %v450, 0.0
        %519 = vadd.xlane.f32.xlu0 %v518
        %v520 = vpop.xlane.xlu0 %519
        %v521 = vsel %vm306, %v451, 0.0
        %522 = vadd.xlane.f32.xlu0 %v521
        %v523 = vpop.xlane.xlu0 %522
        %v524 = vmul.f32 %v454, %v379
        %v525 = vmul.f32 %v457, %v379
        %v526 = vmul.f32 %v460, %v379
        %v527 = vmul.f32 %v463, %v379
        %v528 = vmul.f32 %v466, %v379
        %v529 = vmul.f32 %v469, %v379
        %v530 = vmul.f32 %v472, %v379
        %v531 = vmul.f32 %v475, %v379
        %v532 = vmul.f32 %v478, %v379
        %v533 = vmul.f32 %v481, %v379
        %v534 = vmul.f32 %v484, %v379
        %v535 = vmul.f32 %v487, %v379
        %v536 = vmul.f32 %v490, %v379
        %v537 = vmul.f32 %v493, %v379
        %v538 = vmul.f32 %v496, %v379
        %v539 = vmul.f32 %v499, %v379
        %v540 = vmul.f32 %v502, %v379
        %v541 = vmul.f32 %v505, %v379
        %v542 = vmul.f32 %v508, %v379
        %v543 = vmul.f32 %v511, %v379
        %v544 = vmul.f32 %v514, %v379
        %v545 = vmul.f32 %v517, %v379
        %v546 = vmul.f32 %v520, %v379
        %v547 = vmul.f32 %v523, %v379
        %v548 = vadd.f32 %v524, 1e-05
        %v549 = vadd.f32 %v525, 1e-05
        %v550 = vadd.f32 %v526, 1e-05
        %v551 = vadd.f32 %v527, 1e-05
        %v552 = vadd.f32 %v528, 1e-05
        %v553 = vadd.f32 %v529, 1e-05
        %v554 = vadd.f32 %v530, 1e-05
        %v555 = vadd.f32 %v531, 1e-05
        %v556 = vadd.f32 %v532, 1e-05
        %v557 = vadd.f32 %v533, 1e-05
        %v558 = vadd.f32 %v534, 1e-05
        %v559 = vadd.f32 %v535, 1e-05
        %v560 = vadd.f32 %v536, 1e-05
        %v561 = vadd.f32 %v537, 1e-05
        %v562 = vadd.f32 %v538, 1e-05
        %v563 = vadd.f32 %v539, 1e-05
        %v564 = vadd.f32 %v540, 1e-05
        %v565 = vadd.f32 %v541, 1e-05
        %v566 = vadd.f32 %v542, 1e-05
        %v567 = vadd.f32 %v543, 1e-05
        %v568 = vadd.f32 %v544, 1e-05
        %v569 = vadd.f32 %v545, 1e-05
        %v570 = vadd.f32 %v546, 1e-05
        %v571 = vadd.f32 %v547, 1e-05
        %v572 = vrsqrt.pop %v548
        %v573 = vrsqrt.pop %v549
        %v574 = vrsqrt.pop %v550
        %v575 = vrsqrt.pop %v551
        %v576 = vrsqrt.pop %v552
        %v577 = vrsqrt.pop %v553
        %v578 = vrsqrt.pop %v554
        %v579 = vrsqrt.pop %v555
        %v580 = vrsqrt.pop %v556
        %v581 = vrsqrt.pop %v557
        %v582 = vrsqrt.pop %v558
        %v583 = vrsqrt.pop %v559
        %v584 = vrsqrt.pop %v560
        %v585 = vrsqrt.pop %v561
        %v586 = vrsqrt.pop %v562
        %v587 = vrsqrt.pop %v563
        %v588 = vrsqrt.pop %v564
        %v589 = vrsqrt.pop %v565
        %v590 = vrsqrt.pop %v566
        %v591 = vrsqrt.pop %v567
        %v592 = vrsqrt.pop %v568
        %v593 = vrsqrt.pop %v569
        %v594 = vrsqrt.pop %v570
        %v595 = vrsqrt.pop %v571
        %v596 = vmul.f32 %v404, %v572
        %v597 = vmul.f32 %v405, %v573
        %v598 = vmul.f32 %v406, %v574
        %v599 = vmul.f32 %v407, %v575
        %v600 = vmul.f32 %v408, %v576
        %v601 = vmul.f32 %v409, %v577
        %v602 = vmul.f32 %v410, %v578
        %v603 = vmul.f32 %v411, %v579
        %v604 = vmul.f32 %v412, %v580
        %v605 = vmul.f32 %v413, %v581
        %v606 = vmul.f32 %v414, %v582
        %v607 = vmul.f32 %v415, %v583
        %v608 = vmul.f32 %v416, %v584
        %v609 = vmul.f32 %v417, %v585
        %v610 = vmul.f32 %v418, %v586
        %v611 = vmul.f32 %v419, %v587
        %v612 = vmul.f32 %v420, %v588
        %v613 = vmul.f32 %v421, %v589
        %v614 = vmul.f32 %v422, %v590
        %v615 = vmul.f32 %v423, %v591
        %v616 = vmul.f32 %v424, %v592
        %v617 = vmul.f32 %v425, %v593
        %v618 = vmul.f32 %v426, %v594
        %v619 = vmul.f32 %v427, %v595
        %v620 = vld [vmem:[%s277] sm:$0x1]
        %v622 = vlaneseq
        %v623 = vshrl.u32 %v622, 7
        %v624 = vsub.s32 0, %v623
        %v625 = vrot.slane %v620, %v624
        %v627 = vmul.f32 %v596, %v625
        %v628 = vmul.f32 %v597, %v625
        %v629 = vmul.f32 %v598, %v625
        %v630 = vmul.f32 %v599, %v625
        %v631 = vmul.f32 %v600, %v625
        %v632 = vmul.f32 %v601, %v625
        %v633 = vmul.f32 %v602, %v625
        %v634 = vmul.f32 %v603, %v625
        %v635 = vmul.f32 %v604, %v625
        %v636 = vmul.f32 %v605, %v625
        %v637 = vmul.f32 %v606, %v625
        %v638 = vmul.f32 %v607, %v625
        %v639 = vmul.f32 %v608, %v625
        %v640 = vmul.f32 %v609, %v625
        %v641 = vmul.f32 %v610, %v625
        %v642 = vmul.f32 %v611, %v625
        %v643 = vmul.f32 %v612, %v625
        %v644 = vmul.f32 %v613, %v625
        %v645 = vmul.f32 %v614, %v625
        %v646 = vmul.f32 %v615, %v625
        %v647 = vmul.f32 %v616, %v625
        %v648 = vmul.f32 %v617, %v625
        %v649 = vmul.f32 %v618, %v625
        %v650 = vmul.f32 %v619, %v625
        %v651 = vld [vmem:[%s280] sm:$0x1]
        %v653 = vlaneseq
        %v654 = vshrl.u32 %v653, 7
        %v655 = vsub.s32 0, %v654
        %v656 = vrot.slane %v651, %v655
        %v658 = vadd.f32 %v627, %v656
        %v659 = vadd.f32 %v628, %v656
        %v660 = vadd.f32 %v629, %v656
        %v661 = vadd.f32 %v630, %v656
        %v662 = vadd.f32 %v631, %v656
        %v663 = vadd.f32 %v632, %v656
        %v664 = vadd.f32 %v633, %v656
        %v665 = vadd.f32 %v634, %v656
        %v666 = vadd.f32 %v635, %v656
        %v667 = vadd.f32 %v636, %v656
        %v668 = vadd.f32 %v637, %v656
        %v669 = vadd.f32 %v638, %v656
        %v670 = vadd.f32 %v639, %v656
        %v671 = vadd.f32 %v640, %v656
        %v672 = vadd.f32 %v641, %v656
        %v673 = vadd.f32 %v642, %v656
        %v674 = vadd.f32 %v643, %v656
        %v675 = vadd.f32 %v644, %v656
        %v676 = vadd.f32 %v645, %v656
        %v677 = vadd.f32 %v646, %v656
        %v678 = vadd.f32 %v647, %v656
        %v679 = vadd.f32 %v648, %v656
        %v680 = vadd.f32 %v649, %v656
        %v681 = vadd.f32 %v650, %v656
        %v682 = vld [vmem:[%s3] sm:$0xff]
        %v683 = vld [vmem:[%s3 + $0x8] sm:$0xff]
        %v684 = vld [vmem:[%s3 + $0x10] sm:$0xff]
        %v685 = vld [vmem:[%s3 + $0x18] sm:$0xff]
        %v686 = vld [vmem:[%s3 + $0x20] sm:$0xff]
        %v687 = vld [vmem:[%s3 + $0x28] sm:$0xff]
        %v688 = vld [vmem:[%s3 + $0x30] sm:$0xff]
        %v689 = vld [vmem:[%s3 + $0x38] sm:$0xff]
        %v690 = vld [vmem:[%s3 + $0x40] sm:$0xff]
        %v691 = vld [vmem:[%s3 + $0x48] sm:$0xff]
        %v692 = vld [vmem:[%s3 + $0x50] sm:$0xff]
        %v693 = vld [vmem:[%s3 + $0x58] sm:$0xff]
        %v694 = vld [vmem:[%s3 + $0x60] sm:$0xff]
        %v695 = vld [vmem:[%s3 + $0x68] sm:$0xff]
        %v696 = vld [vmem:[%s3 + $0x70] sm:$0xff]
        %v697 = vld [vmem:[%s3 + $0x78] sm:$0xff]
        %v698 = vld [vmem:[%s4] sm:$0x3]
        %v700 = vlaneseq
        %v701 = vshrl.u32 %v700, 7
        %v702 = vsub.s32 0, %v701
        %v703 = vrot.slane %v698, %v702
        %v704 = vlaneseq
        %v705 = vshrl.u32 %v704, 7
        %v706 = vsub.s32 1, %v705
        %v707 = vrot.slane %v698, %v706
        %v711 = vsel %vm306, %v658, 0
        %v714 = vsel %vm306, %v659, 0
        %v717 = vsel %vm306, %v660, 0
        %v720 = vsel %vm306, %v661, 0
        %v723 = vsel %vm306, %v662, 0
        %v726 = vsel %vm306, %v663, 0
        %v729 = vsel %vm306, %v664, 0
        %v732 = vsel %vm306, %v665, 0
        %v735 = vsel %vm306, %v666, 0
        %v738 = vsel %vm306, %v667, 0
        %v741 = vsel %vm306, %v668, 0
        %v744 = vsel %vm306, %v669, 0
        %v747 = vsel %vm306, %v670, 0
        %v750 = vsel %vm306, %v671, 0
        %v753 = vsel %vm306, %v672, 0
        %v756 = vsel %vm306, %v673, 0
        %v759 = vsel %vm306, %v674, 0
        %v762 = vsel %vm306, %v675, 0
        %v765 = vsel %vm306, %v676, 0
        %v768 = vsel %vm306, %v677, 0
        %v771 = vsel %vm306, %v678, 0
        %v774 = vsel %vm306, %v679, 0
        %v777 = vsel %vm306, %v680, 0
        %v780 = vsel %vm306, %v681, 0
        %782 = vmatprep.subr.mxu0 %v683
        %783 = vmatpush1.msra.mxu0 %v682
        %784 = vmatprep.subr.mxu0 %v685
        %785 = vmatpush1.msra.mxu0 %v684
        %786 = vmatprep.subr.mxu0 %v687
        %787 = vmatpush1.msra.mxu0 %v686
        %788 = vmatprep.subr.mxu0 %v689
        %789 = vmatpush1.msra.mxu0 %v688
        %790 = vmatprep.subr.mxu0 %v691
        %791 = vmatpush1.msra.mxu0 %v690
        %792 = vmatprep.subr.mxu0 %v693
        %793 = vmatpush1.msra.mxu0 %v692
        %794 = vmatprep.subr.mxu0 %v695
        %795 = vmatpush1.msra.mxu0 %v694
        %796 = vmatprep.subr.mxu0 %v697
        %797 = vmatpush1.msra.mxu0 %v696
        %798 = vmatprep.subr.mxu0 0.0
        %799 = vmatpush1.msra.mxu0 0.0
        %800 = vmatprep.subr.mxu0 0.0
        %801 = vmatpush1.msra.mxu0 0.0
        %802 = vmatprep.subr.mxu0 0.0
        %803 = vmatpush1.msra.mxu0 0.0
        %804 = vmatprep.subr.mxu0 0.0
        %805 = vmatpush1.msra.mxu0 0.0
        %806 = vmatprep.subr.mxu0 0.0
        %807 = vmatpush1.msra.mxu0 0.0
        %808 = vmatprep.subr.mxu0 0.0
        %809 = vmatpush1.msra.mxu0 0.0
        %810 = vmatprep.subr.mxu0 0.0
        %811 = vmatpush1.msra.mxu0 0.0
        %812 = vmatprep.subr.mxu0 0.0
        %813 = vmatpush1.msra.mxu0 0.0
        %814 = vmatprep.subr.mxu0 0.0
        %815 = vmatpush1.msra.mxu0 0.0
        %816 = vmatprep.subr.mxu0 0.0
        %817 = vmatpush1.msra.mxu0 0.0
        %818 = vmatprep.subr.mxu0 0.0
        %819 = vmatpush1.msra.mxu0 0.0
        %820 = vmatprep.subr.mxu0 0.0
        %821 = vmatpush1.msra.mxu0 0.0
        %822 = vmatprep.subr.mxu0 0.0
        %823 = vmatpush1.msra.mxu0 0.0
        %824 = vmatprep.subr.mxu0 0.0
        %825 = vmatpush1.msra.mxu0 0.0
        %826 = vmatprep.subr.mxu0 0.0
        %827 = vmatpush1.msra.mxu0 0.0
        %828 = vmatprep.subr.mxu0 0.0
        %829 = vmatpush1.msra.mxu0 0.0
        %830 = vmatprep.subr.mxu0 0.0
        %831 = vmatpush1.msra.mxu0 0.0
        %832 = vmatprep.subr.mxu0 0.0
        %833 = vmatpush1.msra.mxu0 0.0
        %834 = vmatprep.subr.mxu0 0.0
        %835 = vmatpush1.msra.mxu0 0.0
        %836 = vmatprep.subr.mxu0 0.0
        %837 = vmatpush1.msra.mxu0 0.0
        %838 = vmatprep.subr.mxu0 0.0
        %839 = vmatpush1.msra.mxu0 0.0
        %840 = vmatprep.subr.mxu0 0.0
        %841 = vmatpush1.msra.mxu0 0.0
        %842 = vmatprep.subr.mxu0 0.0
        %843 = vmatpush1.msra.mxu0 0.0
        %844 = vmatprep.subr.mxu0 0.0
        %845 = vmatpush1.msra.mxu0 0.0
        %846 = vmatprep.mubr.f32.mxu0 0.0
        %847 = vmatmul.mubr.f32.gmra.mrb[0].mxu0 %v711
        %v848 = vpop.f32.mrb[0].mxu0
        %v849 = vadd.f32 %v703, %v848
        %v850 = vpop.f32.mrb[0].mxu0
        %v851 = vadd.f32 %v707, %v850
        %852 = vmatprep.mubr.f32.mxu0 0.0
        %853 = vmatmul.mubr.f32.gmra.mrb[0].mxu0 %v714
        %v854 = vpop.f32.mrb[0].mxu0
        %v855 = vadd.f32 %v703, %v854
        %v856 = vpop.f32.mrb[0].mxu0
        %v857 = vadd.f32 %v707, %v856
        %858 = vmatprep.mubr.f32.mxu0 0.0
        %859 = vmatmul.mubr.f32.gmra.mrb[0].mxu0 %v717
        %v860 = vpop.f32.mrb[0].mxu0
        %v861 = vadd.f32 %v703, %v860
        %v862 = vpop.f32.mrb[0].mxu0
        %v863 = vadd.f32 %v707, %v862
        %864 = vmatprep.mubr.f32.mxu0 0.0
        %865 = vmatmul.mubr.f32.gmra.mrb[0].mxu0 %v720
        %v866 = vpop.f32.mrb[0].mxu0
        %v867 = vadd.f32 %v703, %v866
        %v868 = vpop.f32.mrb[0].mxu0
        %v869 = vadd.f32 %v707, %v868
        %870 = vmatprep.mubr.f32.mxu0 0.0
        %871 = vmatmul.mubr.f32.gmra.mrb[0].mxu0 %v723
        %v872 = vpop.f32.mrb[0].mxu0
        %v873 = vadd.f32 %v703, %v872
        %v874 = vpop.f32.mrb[0].mxu0
        %v875 = vadd.f32 %v707, %v874
        %876 = vmatprep.mubr.f32.mxu0 0.0
        %877 = vmatmul.mubr.f32.gmra.mrb[0].mxu0 %v726
        %v878 = vpop.f32.mrb[0].mxu0
        %v879 = vadd.f32 %v703, %v878
        %v880 = vpop.f32.mrb[0].mxu0
        %v881 = vadd.f32 %v707, %v880
        %882 = vmatprep.mubr.f32.mxu0 0.0
        %883 = vmatmul.mubr.f32.gmra.mrb[0].mxu0 %v729
        %v884 = vpop.f32.mrb[0].mxu0
        %v885 = vadd.f32 %v703, %v884
        %v886 = vpop.f32.mrb[0].mxu0
        %v887 = vadd.f32 %v707, %v886
        %888 = vmatprep.mubr.f32.mxu0 0.0
        %889 = vmatmul.mubr.f32.gmra.mrb[0].mxu0 %v732
        %v890 = vpop.f32.mrb[0].mxu0
        %v891 = vadd.f32 %v703, %v890
        %v892 = vpop.f32.mrb[0].mxu0
        %v893 = vadd.f32 %v707, %v892
        %894 = vmatprep.mubr.f32.mxu0 0.0
        %895 = vmatmul.mubr.f32.gmra.mrb[0].mxu0 %v735
        %v896 = vpop.f32.mrb[0].mxu0
        %v897 = vadd.f32 %v703, %v896
        %v898 = vpop.f32.mrb[0].mxu0
        %v899 = vadd.f32 %v707, %v898
        %900 = vmatprep.mubr.f32.mxu0 0.0
        %901 = vmatmul.mubr.f32.gmra.mrb[0].mxu0 %v738
        %v902 = vpop.f32.mrb[0].mxu0
        %v903 = vadd.f32 %v703, %v902
        %v904 = vpop.f32.mrb[0].mxu0
        %v905 = vadd.f32 %v707, %v904
        %906 = vmatprep.mubr.f32.mxu0 0.0
        %907 = vmatmul.mubr.f32.gmra.mrb[0].mxu0 %v741
        %v908 = vpop.f32.mrb[0].mxu0
        %v909 = vadd.f32 %v703, %v908
        %v910 = vpop.f32.mrb[0].mxu0
        %v911 = vadd.f32 %v707, %v910
        %912 = vmatprep.mubr.f32.mxu0 0.0
        %913 = vmatmul.mubr.f32.gmra.mrb[0].mxu0 %v744
        %v914 = vpop.f32.mrb[0].mxu0
        %v915 = vadd.f32 %v703, %v914
        %v916 = vpop.f32.mrb[0].mxu0
        %v917 = vadd.f32 %v707, %v916
        %918 = vmatprep.mubr.f32.mxu0 0.0
        %919 = vmatmul.mubr.f32.gmra.mrb[0].mxu0 %v747
        %v920 = vpop.f32.mrb[0].mxu0
        %v921 = vadd.f32 %v703, %v920
        %v922 = vpop.f32.mrb[0].mxu0
        %v923 = vadd.f32 %v707, %v922
        %924 = vmatprep.mubr.f32.mxu0 0.0
        %925 = vmatmul.mubr.f32.gmra.mrb[0].mxu0 %v750
        %v926 = vpop.f32.mrb[0].mxu0
        %v927 = vadd.f32 %v703, %v926
        %v928 = vpop.f32.mrb[0].mxu0
        %v929 = vadd.f32 %v707, %v928
        %930 = vmatprep.mubr.f32.mxu0 0.0
        %931 = vmatmul.mubr.f32.gmra.mrb[0].mxu0 %v753
        %v932 = vpop.f32.mrb[0].mxu0
        %v933 = vadd.f32 %v703, %v932
        %v934 = vpop.f32.mrb[0].mxu0
        %v935 = vadd.f32 %v707, %v934
        %936 = vmatprep.mubr.f32.mxu0 0.0
        %937 = vmatmul.mubr.f32.gmra.mrb[0].mxu0 %v756
        %v938 = vpop.f32.mrb[0].mxu0
        %v939 = vadd.f32 %v703, %v938
        %v940 = vpop.f32.mrb[0].mxu0
        %v941 = vadd.f32 %v707, %v940
        %942 = vmatprep.mubr.f32.mxu0 0.0
        %943 = vmatmul.mubr.f32.gmra.mrb[0].mxu0 %v759
        %v944 = vpop.f32.mrb[0].mxu0
        %v945 = vadd.f32 %v703, %v944
        %v946 = vpop.f32.mrb[0].mxu0
        %v947 = vadd.f32 %v707, %v946
        %948 = vmatprep.mubr.f32.mxu0 0.0
        %949 = vmatmul.mubr.f32.gmra.mrb[0].mxu0 %v762
        %v950 = vpop.f32.mrb[0].mxu0
        %v951 = vadd.f32 %v703, %v950
        %v952 = vpop.f32.mrb[0].mxu0
        %v953 = vadd.f32 %v707, %v952
        %954 = vmatprep.mubr.f32.mxu0 0.0
        %955 = vmatmul.mubr.f32.gmra.mrb[0].mxu0 %v765
        %v956 = vpop.f32.mrb[0].mxu0
        %v957 = vadd.f32 %v703, %v956
        %v958 = vpop.f32.mrb[0].mxu0
        %v959 = vadd.f32 %v707, %v958
        %960 = vmatprep.mubr.f32.mxu0 0.0
        %961 = vmatmul.mubr.f32.gmra.mrb[0].mxu0 %v768
        %v962 = vpop.f32.mrb[0].mxu0
        %v963 = vadd.f32 %v703, %v962
        %v964 = vpop.f32.mrb[0].mxu0
        %v965 = vadd.f32 %v707, %v964
        %966 = vmatprep.mubr.f32.mxu0 0.0
        %967 = vmatmul.mubr.f32.gmra.mrb[0].mxu0 %v771
        %v968 = vpop.f32.mrb[0].mxu0
        %v969 = vadd.f32 %v703, %v968
        %v970 = vpop.f32.mrb[0].mxu0
        %v971 = vadd.f32 %v707, %v970
        %972 = vmatprep.mubr.f32.mxu0 0.0
        %973 = vmatmul.mubr.f32.gmra.mrb[0].mxu0 %v774
        %v974 = vpop.f32.mrb[0].mxu0
        %v975 = vadd.f32 %v703, %v974
        %v976 = vpop.f32.mrb[0].mxu0
        %v977 = vadd.f32 %v707, %v976
        %978 = vmatprep.mubr.f32.mxu0 0.0
        %979 = vmatmul.mubr.f32.gmra.mrb[0].mxu0 %v777
        %v980 = vpop.f32.mrb[0].mxu0
        %v981 = vadd.f32 %v703, %v980
        %v982 = vpop.f32.mrb[0].mxu0
        %v983 = vadd.f32 %v707, %v982
        %984 = vmatprep.mubr.f32.mxu0 0.0
        %985 = vmatmul.mubr.f32.gmra.mrb[0].mxu0 %v780
        %v986 = vpop.f32.mrb[0].mxu0
        %v987 = vadd.f32 %v703, %v986
        %v988 = vpop.f32.mrb[0].mxu0
        %v989 = vadd.f32 %v707, %v988
        %990 = vdwg.mxu0
        %991 = vst [vmem:[%s264] sm:$0xff] %v849
        %992 = vst.msk [vmem:[%s264 + $0x8] sm:$0xff] %vm306, %v851
        %993 = vst [vmem:[%s264 + $0x10] sm:$0xff] %v855
        %994 = vst.msk [vmem:[%s264 + $0x18] sm:$0xff] %vm306, %v857
        %995 = vst [vmem:[%s264 + $0x20] sm:$0xff] %v861
        %996 = vst.msk [vmem:[%s264 + $0x28] sm:$0xff] %vm306, %v863
        %997 = vst [vmem:[%s264 + $0x30] sm:$0xff] %v867
        %998 = vst.msk [vmem:[%s264 + $0x38] sm:$0xff] %vm306, %v869
        %999 = vst [vmem:[%s264 + $0x40] sm:$0xff] %v873
        %1000 = vst.msk [vmem:[%s264 + $0x48] sm:$0xff] %vm306, %v875
        %1001 = vst [vmem:[%s264 + $0x50] sm:$0xff] %v879
        %1002 = vst.msk [vmem:[%s264 + $0x58] sm:$0xff] %vm306, %v881
        %1003 = vst [vmem:[%s264 + $0x60] sm:$0xff] %v885
        %1004 = vst.msk [vmem:[%s264 + $0x68] sm:$0xff] %vm306, %v887
        %1005 = vst [vmem:[%s264 + $0x70] sm:$0xff] %v891
        %1006 = vst.msk [vmem:[%s264 + $0x78] sm:$0xff] %vm306, %v893
        %1007 = vst [vmem:[%s264 + $0x80] sm:$0xff] %v897
        %1008 = vst.msk [vmem:[%s264 + $0x88] sm:$0xff] %vm306, %v899
        %1009 = vst [vmem:[%s264 + $0x90] sm:$0xff] %v903
        %1010 = vst.msk [vmem:[%s264 + $0x98] sm:$0xff] %vm306, %v905
        %1011 = vst [vmem:[%s264 + $0xa0] sm:$0xff] %v909
        %1012 = vst.msk [vmem:[%s264 + $0xa8] sm:$0xff] %vm306, %v911
        %1013 = vst [vmem:[%s264 + $0xb0] sm:$0xff] %v915
        %1014 = vst.msk [vmem:[%s264 + $0xb8] sm:$0xff] %vm306, %v917
        %1015 = vst [vmem:[%s264 + $0xc0] sm:$0xff] %v921
        %1016 = vst.msk [vmem:[%s264 + $0xc8] sm:$0xff] %vm306, %v923
        %1017 = vst [vmem:[%s264 + $0xd0] sm:$0xff] %v927
        %1018 = vst.msk [vmem:[%s264 + $0xd8] sm:$0xff] %vm306, %v929
        %1019 = vst [vmem:[%s264 + $0xe0] sm:$0xff] %v933
        %1020 = vst.msk [vmem:[%s264 + $0xe8] sm:$0xff] %vm306, %v935
        %1021 = vst [vmem:[%s264 + $0xf0] sm:$0xff] %v939
        %1022 = vst.msk [vmem:[%s264 + $0xf8] sm:$0xff] %vm306, %v941
        %1023 = vst [vmem:[%s264 + $0x100] sm:$0xff] %v945
        %1024 = vst.msk [vmem:[%s264 + $0x108] sm:$0xff] %vm306, %v947
        %1025 = vst [vmem:[%s264 + $0x110] sm:$0xff] %v951
        %1026 = vst.msk [vmem:[%s264 + $0x118] sm:$0xff] %vm306, %v953
        %1027 = vst [vmem:[%s264 + $0x120] sm:$0xff] %v957
        %1028 = vst.msk [vmem:[%s264 + $0x128] sm:$0xff] %vm306, %v959
        %1029 = vst [vmem:[%s264 + $0x130] sm:$0xff] %v963
        %1030 = vst.msk [vmem:[%s264 + $0x138] sm:$0xff] %vm306, %v965
        %1031 = vst [vmem:[%s264 + $0x140] sm:$0xff] %v969
        %1032 = vst.msk [vmem:[%s264 + $0x148] sm:$0xff] %vm306, %v971
        %1033 = vst [vmem:[%s264 + $0x150] sm:$0xff] %v975
        %1034 = vst.msk [vmem:[%s264 + $0x158] sm:$0xff] %vm306, %v977
        %1035 = vst [vmem:[%s264 + $0x160] sm:$0xff] %v981
        %1036 = vst.msk [vmem:[%s264 + $0x168] sm:$0xff] %vm306, %v983
        %1037 = vst [vmem:[%s264 + $0x170] sm:$0xff] %v987
        %1038 = vst.msk [vmem:[%s264 + $0x178] sm:$0xff] %vm306, %v989
        %s1039 = sand.u32 %s163, 1
        %s1040 = scalar_lea.sflag [#allocation3], %s1039
        %s1041 = sand.u32 %s163, 1
        %s1042 = smul.addr %s1041, 384
        %s1043 = scalar_lea.vmem [#allocation2], %s1042
        // Predicated region
        $region41: #{tpu_custom_call.1} parent=39 // pred_check
          %p1044 = pneg %p173
        $region42: #{tpu_custom_call.1} parent=39 // pred_check_branch
          %1046 = sbr.rel (%p1044) target = $region44
        $region43: #{tpu_custom_call.1} parent=39 // pred_region
          %s1047 = smul.u32 24, %s24
          %s1049 = ssub.s32 6144, 6144
          %1050 = vsyncadd %s1040, %s1049
          %s1051 = smul.addr %s1047, 2
          %s1052 = smul.addr %s23, 48
          %s1053 = sadd.s32 %s1051, %s1052
          %s1054 = smul.addr %s1053, 128
          %s1055 = scalar_lea.hbm %s5, %s1054
          %s1056 = sshll.u32 %s1043, 4
          %s1057 = int_to_ptr.vmem [resolvable:$true] %s1056
          %1062 = dma.vmem_to_hbm [thread:$0]  %s1057, 6144, %s1055, %s1040, 256, 256, 16
        $region44: #{tpu_custom_call.1} parent=39 // pred_fallthru
          _
      $region40: #{tpu_custom_call.1} parent=5 // pred_fallthru
        _
      %p1063 = scmp.le.s32.totalorder 2, %s14
      // Predicated region
      $region45: #{tpu_custom_call.1} parent=5 // pred_check
        %p1064 = pneg %p1063
      $region46: #{tpu_custom_call.1} parent=5 // pred_check_branch
        %1066 = sbr.rel (%p1064) target = $region48
      $region47: #{tpu_custom_call.1} parent=5 // pred_region
        %s1067 = ssub.s32 %s14, 2
        // Predicated region
        $region49: #{tpu_custom_call.1} parent=47 // pred_check
          %p1068 = pneg %p179
        $region50: #{tpu_custom_call.1} parent=47 // pred_check_branch
          %1070 = sbr.rel (%p1068) target = $region52
        $region51: #{tpu_custom_call.1} parent=47 // pred_region
          %s1071 = sand.u32 %s164, 1
          %s1072 = scalar_lea.sflag [#allocation3], %s1071
          %s1073 = sand.u32 %s164, 1
          %s1074 = smul.addr %s1073, 384
          %s1075 = scalar_lea.vmem [#allocation2], %s1074
          %1076 = dma.done %s1072, 6144
        $region52: #{tpu_custom_call.1} parent=47 // pred_fallthru
          _
      $region48: #{tpu_custom_call.1} parent=5 // pred_fallthru
        _
    $region6: #{tpu_custom_call.1} parent=1 // loop_footer
      %s18 = sadd.s32 1, %s14
    $region7: #{tpu_custom_call.1} parent=1 // loop_footer_branch
      %13 = sbr.rel target = $region3
    $region8: #{tpu_custom_call.1} parent=1 // loop_exit
      _
    %1077 = vsyncpa [#allocation3], 1
    %s1078 = scalar_lea.sflag [#allocation3], 1
    %1079 = vsyncpa %s1078, 1

</llo_original>
